<compile_context>
chip_gen: v5e
topology: v5e:2x2
jax: 0.10.0
libtpu: 0.0.40
codegen_flags: <defaults>
</compile_context>

<pallas_src>
import jax
import jax.numpy as jnp
import numpy as np
from jax.experimental import pallas as pl
from jax.experimental.pallas import tpu as pltpu

KERNEL_SIZE = 3   # Conv1d kernel_size
O_PAD = 128       # conv out_channels (100) zero-padded to a full lane width
OUT_LANES = 128   # lane-dense output slab width


def cnn_kernel(ids_ref, table_ref, wconv_ref, bconv_ref, wfc_ref, bfc_ref,
               out_ref, emb_ref):
    # ids_ref:   (B, L)      int32, SMEM (scalar-prefetched token ids)
    # table_ref: (V, C)      f32, VMEM embedding table
    # wconv_ref: (C, K*OP)   f32, fused conv weight, lane index = k*OP + o
    # bconv_ref: (1, OP)     f32, conv bias (zero padded to OP lanes)
    # wfc_ref:   (Lp, OP)    f32, fc weight permuted to pooled (t, o) layout
    # bfc_ref:   (1, 1)      f32, SMEM fc bias
    # out_ref:   (1, 1, 128) f32, lane-dense sigmoid output for this batch row
    # emb_ref:   (L, C)      f32, VMEM scratch for gathered embeddings
    b = pl.program_id(0)
    L, C = emb_ref.shape
    OP = bconv_ref.shape[1]
    K = wconv_ref.shape[1] // OP
    Lout = L - K + 1
    Lp = wfc_ref.shape[0]

    # --- Embedding: direct row gather from the VMEM table (no one-hot) ---
    for i in range(L):                       # L is small; static unroll
        tok = ids_ref[b, i]                  # SMEM scalar read
        emb_ref[pl.ds(i, 1), :] = table_ref[pl.ds(tok, 1), :]
    emb = emb_ref[...]                       # (L, C)

    # --- Conv1d(C->O, k=3, valid) as ONE fused MXU matmul: (L,C)@(C,K*OP) ---
    conv_full = jnp.dot(emb, wconv_ref[...],
                        preferred_element_type=jnp.float32)     # (L, K*OP)
    conv = conv_full[0:Lout, 0:OP]           # tap k=0 doubles as accumulator
    for k in range(1, K):                    # taps k=1..K-1: shifted out slices
        conv = conv + conv_full[k:k + Lout, k * OP:(k + 1) * OP]
    conv = conv + bconv_ref[...]             # (Lout, OP), bias broadcast

    # --- MaxPool1d(kernel=2, stride=2) over the time axis ---
    pooled = jnp.max(conv[:2 * Lp, :].reshape(Lp, 2, OP), axis=1)   # (Lp, OP)

    # --- Linear(O*Lp -> 1) + sigmoid; wfc is permuted/zero-padded so an
    #     elementwise mul + full reduce matches torch's channel-major flatten
    #     (flat index o*Lp + t). Padded lanes carry zero weight. ---
    logit = jnp.sum(pooled * wfc_ref[...], axis=(0, 1), keepdims=True)  # (1,1)
    logit = logit + bfc_ref[0, 0]
    out_ref[...] = jax.nn.sigmoid(
        jnp.broadcast_to(logit.reshape(1, 1, 1), out_ref.shape)
    ).astype(out_ref.dtype)


def cnn_forward(ids, table, w_conv, b_conv, w_fc, b_fc):
    """PyTorch-layout parameters in, (B, 1) sigmoid probabilities out."""
    B, L = ids.shape
    V, C = table.shape
    O, _, K = w_conv.shape
    Lout = L - K + 1
    Lp = Lout // 2
    OP = O_PAD
    assert O <= OP

    # Glue: zero-pad O -> OP and permute into the kernel's layouts.
    w_pad = jnp.zeros((OP, C, K), jnp.float32).at[:O].set(w_conv)
    wconv_fused = jnp.transpose(w_pad, (1, 2, 0)).reshape(C, K * OP)  # [c, k*OP+o]
    bconv_p = jnp.zeros((1, OP), jnp.float32).at[0, :O].set(b_conv)
    wfc_p = jnp.zeros((Lp, OP), jnp.float32).at[:, :O].set(
        w_fc.reshape(O, Lp).T)                                        # [t, o]
    bfc_2d = b_fc.reshape(1, 1).astype(jnp.float32)

    grid_spec = pltpu.PrefetchScalarGridSpec(
        num_scalar_prefetch=1,            # token ids -> SMEM
        grid=(B,),                        # one program per batch row
        in_specs=[
            pl.BlockSpec((V, C), lambda b, _ids: (0, 0)),          # embedding table
            pl.BlockSpec((C, K * OP), lambda b, _ids: (0, 0)),     # fused conv weight
            pl.BlockSpec((1, OP), lambda b, _ids: (0, 0)),         # conv bias
            pl.BlockSpec((Lp, OP), lambda b, _ids: (0, 0)),        # fc weight
            pl.BlockSpec(memory_space=pltpu.MemorySpace.SMEM),     # fc bias scalar
        ],
        out_specs=pl.BlockSpec((1, 1, OUT_LANES), lambda b, _ids: (b, 0, 0)),
        scratch_shapes=[pltpu.VMEM((L, C), jnp.float32)],
    )
    out_padded = pl.pallas_call(
        cnn_kernel,
        out_shape=jax.ShapeDtypeStruct((B, 1, OUT_LANES), jnp.float32),
        grid_spec=grid_spec,
        compiler_params=pltpu.CompilerParams(
            dimension_semantics=("parallel",)),
    )(ids, table, wconv_fused, bconv_p, wfc_p, bfc_2d)
    return out_padded[:, 0, :1]           # (B, 1)


if __name__ == "__main__":
    # Small shapes consistent with the module's forward.
    B, L = 2, 16                     # batch, sequence length ("max_length")
    vocab_size = 50
    embedding_dim = 32
    out_channels = 100
    Lout = L - KERNEL_SIZE + 1       # 14
    Lp = Lout // 2                   # 7 ; fc.in_features = 100 * 7 = 700

    key = jax.random.PRNGKey(0)
    k_emb, k_wc, k_bc, k_wf, k_bf, k_ids = jax.random.split(key, 6)

    # Deterministic synthetic parameters (PyTorch-native layouts).
    table = jax.random.normal(k_emb, (vocab_size, embedding_dim), jnp.float32)
    w_conv = jax.random.normal(k_wc, (out_channels, embedding_dim, KERNEL_SIZE),
                               jnp.float32) * 0.05
    b_conv = jax.random.normal(k_bc, (out_channels,), jnp.float32) * 0.05
    w_fc = jax.random.normal(k_wf, (1, out_channels * Lp), jnp.float32) * 0.02
    b_fc = jax.random.normal(k_bf, (1,), jnp.float32)
    ids = jax.random.randint(k_ids, (B, L), 0, vocab_size, dtype=jnp.int32)

    out = jax.block_until_ready(
        cnn_forward(ids, table, w_conv, b_conv, w_fc, b_fc))

    # Pure-JAX reference mirroring the PyTorch forward (NCL conv path).
    emb_r = table[ids]                                    # (B, L, C)
    x_ncl = jnp.transpose(emb_r, (0, 2, 1))               # (B, C, L)
    conv_r = jax.lax.conv_general_dilated(
        x_ncl, w_conv, window_strides=(1,), padding="VALID",
        dimension_numbers=("NCH", "OIH", "NCH")) + b_conv[None, :, None]
    pooled_r = jnp.max(conv_r[:, :, :2 * Lp].reshape(B, out_channels, Lp, 2),
                       axis=3)
    flat_r = pooled_r.reshape(B, -1)                      # channel-major flatten
    ref = jax.nn.sigmoid(flat_r @ w_fc.T + b_fc)          # (B, 1)

    assert out.shape == (B, 1)
    np.testing.assert_allclose(np.asarray(out), np.asarray(ref),
                               rtol=1e-4, atol=1e-5)
    print("KERNEL_OK")
</pallas_src>

<mosaic_0001>
module attributes {stable_mosaic.version = 11 : i64} {
  func.func @cnn_kernel(%arg0: i32, %arg1: memref<2x16xi32, #tpu.memory_space<smem>>, %arg2: memref<50x32xf32, #tpu.memory_space<vmem>>, %arg3: memref<32x384xf32, #tpu.memory_space<vmem>>, %arg4: memref<1x128xf32, #tpu.memory_space<vmem>>, %arg5: memref<7x128xf32, #tpu.memory_space<vmem>>, %arg6: memref<1x1xf32, #tpu.memory_space<smem>>, %arg7: memref<1x1x128xf32, #tpu.memory_space<vmem>>, %arg8: memref<16x32xf32, #tpu.memory_space<vmem>>) attributes {dimension_semantics = [#tpu.dimension_semantics<parallel>], iteration_bounds = array<i64: 2>, scalar_prefetch = 1 : i64, scratch_operands = 1 : i64, tpu.core_type = #tpu.core_type<tc>, window_params = [{pipeline_mode = #tpu.pipeline_mode<synchronous>, transform_indices = @transform_0, window_bounds = array<i64: 50, 32>}, {pipeline_mode = #tpu.pipeline_mode<synchronous>, transform_indices = @transform_1, window_bounds = array<i64: 32, 384>}, {pipeline_mode = #tpu.pipeline_mode<synchronous>, transform_indices = @transform_2, window_bounds = array<i64: 1, 128>}, {pipeline_mode = #tpu.pipeline_mode<synchronous>, transform_indices = @transform_3, window_bounds = array<i64: 7, 128>}, {transform_indices = @transform_4, window_bounds = array<i64: 1, 1>}, {transform_indices = @transform_5, window_bounds = array<i64: 1, 1, 128>}]} {
    %0 = arith.index_cast %arg0 : i32 to index
    %c0 = arith.constant 0 : index
    %1 = memref.load %arg1[%0, %c0] : memref<2x16xi32, #tpu.memory_space<smem>>
    %2 = arith.index_cast %1 : i32 to index
    %c0_0 = arith.constant 0 : index
    %3 = vector.load %arg2[%2, %c0_0] : memref<50x32xf32, #tpu.memory_space<vmem>>, vector<1x32xf32>
    %c0_1 = arith.constant 0 : index
    %c0_2 = arith.constant 0 : index
    %4 = vector.load %arg8[%c0_1, %c0_2] : memref<16x32xf32, #tpu.memory_space<vmem>>, vector<1x32xf32>
    tpu.vector_store %arg8[%c0_1, %c0_2], %3 {strides = array<i32>} : memref<16x32xf32, #tpu.memory_space<vmem>>, vector<1x32xf32>,
    %5 = arith.index_cast %arg0 : i32 to index
    %c1 = arith.constant 1 : index
    %6 = memref.load %arg1[%5, %c1] : memref<2x16xi32, #tpu.memory_space<smem>>
    %7 = arith.index_cast %6 : i32 to index
    %c0_3 = arith.constant 0 : index
    %8 = vector.load %arg2[%7, %c0_3] : memref<50x32xf32, #tpu.memory_space<vmem>>, vector<1x32xf32>
    %c1_4 = arith.constant 1 : index
    %c0_5 = arith.constant 0 : index
    %9 = vector.load %arg8[%c1_4, %c0_5] : memref<16x32xf32, #tpu.memory_space<vmem>>, vector<1x32xf32>
    tpu.vector_store %arg8[%c1_4, %c0_5], %8 {strides = array<i32>} : memref<16x32xf32, #tpu.memory_space<vmem>>, vector<1x32xf32>,
    %10 = arith.index_cast %arg0 : i32 to index
    %c2 = arith.constant 2 : index
    %11 = memref.load %arg1[%10, %c2] : memref<2x16xi32, #tpu.memory_space<smem>>
    %12 = arith.index_cast %11 : i32 to index
    %c0_6 = arith.constant 0 : index
    %13 = vector.load %arg2[%12, %c0_6] : memref<50x32xf32, #tpu.memory_space<vmem>>, vector<1x32xf32>
    %c2_7 = arith.constant 2 : index
    %c0_8 = arith.constant 0 : index
    %14 = vector.load %arg8[%c2_7, %c0_8] : memref<16x32xf32, #tpu.memory_space<vmem>>, vector<1x32xf32>
    tpu.vector_store %arg8[%c2_7, %c0_8], %13 {strides = array<i32>} : memref<16x32xf32, #tpu.memory_space<vmem>>, vector<1x32xf32>,
    %15 = arith.index_cast %arg0 : i32 to index
    %c3 = arith.constant 3 : index
    %16 = memref.load %arg1[%15, %c3] : memref<2x16xi32, #tpu.memory_space<smem>>
    %17 = arith.index_cast %16 : i32 to index
    %c0_9 = arith.constant 0 : index
    %18 = vector.load %arg2[%17, %c0_9] : memref<50x32xf32, #tpu.memory_space<vmem>>, vector<1x32xf32>
    %c3_10 = arith.constant 3 : index
    %c0_11 = arith.constant 0 : index
    %19 = vector.load %arg8[%c3_10, %c0_11] : memref<16x32xf32, #tpu.memory_space<vmem>>, vector<1x32xf32>
    tpu.vector_store %arg8[%c3_10, %c0_11], %18 {strides = array<i32>} : memref<16x32xf32, #tpu.memory_space<vmem>>, vector<1x32xf32>,
    %20 = arith.index_cast %arg0 : i32 to index
    %c4 = arith.constant 4 : index
    %21 = memref.load %arg1[%20, %c4] : memref<2x16xi32, #tpu.memory_space<smem>>
    %22 = arith.index_cast %21 : i32 to index
    %c0_12 = arith.constant 0 : index
    %23 = vector.load %arg2[%22, %c0_12] : memref<50x32xf32, #tpu.memory_space<vmem>>, vector<1x32xf32>
    %c4_13 = arith.constant 4 : index
    %c0_14 = arith.constant 0 : index
    %24 = vector.load %arg8[%c4_13, %c0_14] : memref<16x32xf32, #tpu.memory_space<vmem>>, vector<1x32xf32>
    tpu.vector_store %arg8[%c4_13, %c0_14], %23 {strides = array<i32>} : memref<16x32xf32, #tpu.memory_space<vmem>>, vector<1x32xf32>,
    %25 = arith.index_cast %arg0 : i32 to index
    %c5 = arith.constant 5 : index
    %26 = memref.load %arg1[%25, %c5] : memref<2x16xi32, #tpu.memory_space<smem>>
    %27 = arith.index_cast %26 : i32 to index
    %c0_15 = arith.constant 0 : index
    %28 = vector.load %arg2[%27, %c0_15] : memref<50x32xf32, #tpu.memory_space<vmem>>, vector<1x32xf32>
    %c5_16 = arith.constant 5 : index
    %c0_17 = arith.constant 0 : index
    %29 = vector.load %arg8[%c5_16, %c0_17] : memref<16x32xf32, #tpu.memory_space<vmem>>, vector<1x32xf32>
    tpu.vector_store %arg8[%c5_16, %c0_17], %28 {strides = array<i32>} : memref<16x32xf32, #tpu.memory_space<vmem>>, vector<1x32xf32>,
    %30 = arith.index_cast %arg0 : i32 to index
    %c6 = arith.constant 6 : index
    %31 = memref.load %arg1[%30, %c6] : memref<2x16xi32, #tpu.memory_space<smem>>
    %32 = arith.index_cast %31 : i32 to index
    %c0_18 = arith.constant 0 : index
    %33 = vector.load %arg2[%32, %c0_18] : memref<50x32xf32, #tpu.memory_space<vmem>>, vector<1x32xf32>
    %c6_19 = arith.constant 6 : index
    %c0_20 = arith.constant 0 : index
    %34 = vector.load %arg8[%c6_19, %c0_20] : memref<16x32xf32, #tpu.memory_space<vmem>>, vector<1x32xf32>
    tpu.vector_store %arg8[%c6_19, %c0_20], %33 {strides = array<i32>} : memref<16x32xf32, #tpu.memory_space<vmem>>, vector<1x32xf32>,
    %35 = arith.index_cast %arg0 : i32 to index
    %c7 = arith.constant 7 : index
    %36 = memref.load %arg1[%35, %c7] : memref<2x16xi32, #tpu.memory_space<smem>>
    %37 = arith.index_cast %36 : i32 to index
    %c0_21 = arith.constant 0 : index
    %38 = vector.load %arg2[%37, %c0_21] : memref<50x32xf32, #tpu.memory_space<vmem>>, vector<1x32xf32>
    %c7_22 = arith.constant 7 : index
    %c0_23 = arith.constant 0 : index
    %39 = vector.load %arg8[%c7_22, %c0_23] : memref<16x32xf32, #tpu.memory_space<vmem>>, vector<1x32xf32>
    tpu.vector_store %arg8[%c7_22, %c0_23], %38 {strides = array<i32>} : memref<16x32xf32, #tpu.memory_space<vmem>>, vector<1x32xf32>,
    %40 = arith.index_cast %arg0 : i32 to index
    %c8 = arith.constant 8 : index
    %41 = memref.load %arg1[%40, %c8] : memref<2x16xi32, #tpu.memory_space<smem>>
    %42 = arith.index_cast %41 : i32 to index
    %c0_24 = arith.constant 0 : index
    %43 = vector.load %arg2[%42, %c0_24] : memref<50x32xf32, #tpu.memory_space<vmem>>, vector<1x32xf32>
    %c8_25 = arith.constant 8 : index
    %c0_26 = arith.constant 0 : index
    %44 = vector.load %arg8[%c8_25, %c0_26] : memref<16x32xf32, #tpu.memory_space<vmem>>, vector<1x32xf32>
    tpu.vector_store %arg8[%c8_25, %c0_26], %43 {strides = array<i32>} : memref<16x32xf32, #tpu.memory_space<vmem>>, vector<1x32xf32>,
    %45 = arith.index_cast %arg0 : i32 to index
    %c9 = arith.constant 9 : index
    %46 = memref.load %arg1[%45, %c9] : memref<2x16xi32, #tpu.memory_space<smem>>
    %47 = arith.index_cast %46 : i32 to index
    %c0_27 = arith.constant 0 : index
    %48 = vector.load %arg2[%47, %c0_27] : memref<50x32xf32, #tpu.memory_space<vmem>>, vector<1x32xf32>
    %c9_28 = arith.constant 9 : index
    %c0_29 = arith.constant 0 : index
    %49 = vector.load %arg8[%c9_28, %c0_29] : memref<16x32xf32, #tpu.memory_space<vmem>>, vector<1x32xf32>
    tpu.vector_store %arg8[%c9_28, %c0_29], %48 {strides = array<i32>} : memref<16x32xf32, #tpu.memory_space<vmem>>, vector<1x32xf32>,
    %50 = arith.index_cast %arg0 : i32 to index
    %c10 = arith.constant 10 : index
    %51 = memref.load %arg1[%50, %c10] : memref<2x16xi32, #tpu.memory_space<smem>>
    %52 = arith.index_cast %51 : i32 to index
    %c0_30 = arith.constant 0 : index
    %53 = vector.load %arg2[%52, %c0_30] : memref<50x32xf32, #tpu.memory_space<vmem>>, vector<1x32xf32>
    %c10_31 = arith.constant 10 : index
    %c0_32 = arith.constant 0 : index
    %54 = vector.load %arg8[%c10_31, %c0_32] : memref<16x32xf32, #tpu.memory_space<vmem>>, vector<1x32xf32>
    tpu.vector_store %arg8[%c10_31, %c0_32], %53 {strides = array<i32>} : memref<16x32xf32, #tpu.memory_space<vmem>>, vector<1x32xf32>,
    %55 = arith.index_cast %arg0 : i32 to index
    %c11 = arith.constant 11 : index
    %56 = memref.load %arg1[%55, %c11] : memref<2x16xi32, #tpu.memory_space<smem>>
    %57 = arith.index_cast %56 : i32 to index
    %c0_33 = arith.constant 0 : index
    %58 = vector.load %arg2[%57, %c0_33] : memref<50x32xf32, #tpu.memory_space<vmem>>, vector<1x32xf32>
    %c11_34 = arith.constant 11 : index
    %c0_35 = arith.constant 0 : index
    %59 = vector.load %arg8[%c11_34, %c0_35] : memref<16x32xf32, #tpu.memory_space<vmem>>, vector<1x32xf32>
    tpu.vector_store %arg8[%c11_34, %c0_35], %58 {strides = array<i32>} : memref<16x32xf32, #tpu.memory_space<vmem>>, vector<1x32xf32>,
    %60 = arith.index_cast %arg0 : i32 to index
    %c12 = arith.constant 12 : index
    %61 = memref.load %arg1[%60, %c12] : memref<2x16xi32, #tpu.memory_space<smem>>
    %62 = arith.index_cast %61 : i32 to index
    %c0_36 = arith.constant 0 : index
    %63 = vector.load %arg2[%62, %c0_36] : memref<50x32xf32, #tpu.memory_space<vmem>>, vector<1x32xf32>
    %c12_37 = arith.constant 12 : index
    %c0_38 = arith.constant 0 : index
    %64 = vector.load %arg8[%c12_37, %c0_38] : memref<16x32xf32, #tpu.memory_space<vmem>>, vector<1x32xf32>
    tpu.vector_store %arg8[%c12_37, %c0_38], %63 {strides = array<i32>} : memref<16x32xf32, #tpu.memory_space<vmem>>, vector<1x32xf32>,
    %65 = arith.index_cast %arg0 : i32 to index
    %c13 = arith.constant 13 : index
    %66 = memref.load %arg1[%65, %c13] : memref<2x16xi32, #tpu.memory_space<smem>>
    %67 = arith.index_cast %66 : i32 to index
    %c0_39 = arith.constant 0 : index
    %68 = vector.load %arg2[%67, %c0_39] : memref<50x32xf32, #tpu.memory_space<vmem>>, vector<1x32xf32>
    %c13_40 = arith.constant 13 : index
    %c0_41 = arith.constant 0 : index
    %69 = vector.load %arg8[%c13_40, %c0_41] : memref<16x32xf32, #tpu.memory_space<vmem>>, vector<1x32xf32>
    tpu.vector_store %arg8[%c13_40, %c0_41], %68 {strides = array<i32>} : memref<16x32xf32, #tpu.memory_space<vmem>>, vector<1x32xf32>,
    %70 = arith.index_cast %arg0 : i32 to index
    %c14 = arith.constant 14 : index
    %71 = memref.load %arg1[%70, %c14] : memref<2x16xi32, #tpu.memory_space<smem>>
    %72 = arith.index_cast %71 : i32 to index
    %c0_42 = arith.constant 0 : index
    %73 = vector.load %arg2[%72, %c0_42] : memref<50x32xf32, #tpu.memory_space<vmem>>, vector<1x32xf32>
    %c14_43 = arith.constant 14 : index
    %c0_44 = arith.constant 0 : index
    %74 = vector.load %arg8[%c14_43, %c0_44] : memref<16x32xf32, #tpu.memory_space<vmem>>, vector<1x32xf32>
    tpu.vector_store %arg8[%c14_43, %c0_44], %73 {strides = array<i32>} : memref<16x32xf32, #tpu.memory_space<vmem>>, vector<1x32xf32>,
    %75 = arith.index_cast %arg0 : i32 to index
    %c15 = arith.constant 15 : index
    %76 = memref.load %arg1[%75, %c15] : memref<2x16xi32, #tpu.memory_space<smem>>
    %77 = arith.index_cast %76 : i32 to index
    %c0_45 = arith.constant 0 : index
    %78 = vector.load %arg2[%77, %c0_45] : memref<50x32xf32, #tpu.memory_space<vmem>>, vector<1x32xf32>
    %c15_46 = arith.constant 15 : index
    %c0_47 = arith.constant 0 : index
    %79 = vector.load %arg8[%c15_46, %c0_47] : memref<16x32xf32, #tpu.memory_space<vmem>>, vector<1x32xf32>
    tpu.vector_store %arg8[%c15_46, %c0_47], %78 {strides = array<i32>} : memref<16x32xf32, #tpu.memory_space<vmem>>, vector<1x32xf32>,
    %c0_48 = arith.constant 0 : index
    %c0_49 = arith.constant 0 : index
    %80 = vector.load %arg8[%c0_48, %c0_49] : memref<16x32xf32, #tpu.memory_space<vmem>>, vector<16x32xf32>
    %c0_50 = arith.constant 0 : index
    %c0_51 = arith.constant 0 : index
    %81 = vector.load %arg3[%c0_50, %c0_51] : memref<32x384xf32, #tpu.memory_space<vmem>>, vector<32x384xf32>
    %cst = arith.constant dense<0.000000e+00> : vector<16x384xf32>
    %82 = tpu.matmul %80, %81, %cst {dimension_numbers = #tpu.dot_dimension_numbers<[1], [0], [0], [1], [0, 0, 1, 1], [], []>} : vector<16x32xf32>, vector<32x384xf32>, vector<16x384xf32> -> vector<16x384xf32>
    %83 = vector.extract_strided_slice %82 {offsets = [0, 0], sizes = [14, 128], strides = [1, 1]} : vector<16x384xf32> to vector<14x128xf32>
    %84 = vector.extract_strided_slice %82 {offsets = [1, 128], sizes = [14, 128], strides = [1, 1]} : vector<16x384xf32> to vector<14x128xf32>
    %85 = arith.addf %83, %84 : vector<14x128xf32>
    %86 = vector.extract_strided_slice %82 {offsets = [2, 256], sizes = [14, 128], strides = [1, 1]} : vector<16x384xf32> to vector<14x128xf32>
    %87 = arith.addf %85, %86 : vector<14x128xf32>
    %c0_52 = arith.constant 0 : index
    %c0_53 = arith.constant 0 : index
    %88 = vector.load %arg4[%c0_52, %c0_53] : memref<1x128xf32, #tpu.memory_space<vmem>>, vector<1x128xf32>
    %89 = vector.broadcast %88 : vector<1x128xf32> to vector<14x128xf32>
    %90 = arith.addf %87, %89 : vector<14x128xf32>
    %91 = vector.shape_cast %90 : vector<14x128xf32> to vector<7x2x128xf32>
    %cst_54 = arith.constant dense<0xFF800000> : vector<7x128xf32>
    %92 = vector.multi_reduction <maximumf>, %91, %cst_54 [1] : vector<7x2x128xf32> to vector<7x128xf32>
    %c0_55 = arith.constant 0 : index
    %c0_56 = arith.constant 0 : index
    %93 = vector.load %arg5[%c0_55, %c0_56] : memref<7x128xf32, #tpu.memory_space<vmem>>, vector<7x128xf32>
    %94 = arith.mulf %92, %93 : vector<7x128xf32>
    %95 = vector.shape_cast %94 : vector<7x128xf32> to vector<1x7x128xf32>
    %cst_57 = arith.constant dense<0.000000e+00> : vector<1xf32>
    %96 = vector.multi_reduction <add>, %95, %cst_57 [1, 2] : vector<1x7x128xf32> to vector<1xf32>
    %97 = vector.shape_cast %96 : vector<1xf32> to vector<1x1x1xf32>
    %98 = vector.extract %97[0, 0, 0] : f32 from vector<1x1x1xf32>
    %99 = vector.broadcast %98 : f32 to vector<1x1xf32>
    %c0_58 = arith.constant 0 : index
    %c0_59 = arith.constant 0 : index
    %100 = memref.load %arg6[%c0_58, %c0_59] : memref<1x1xf32, #tpu.memory_space<smem>>
    %101 = vector.broadcast %100 : f32 to vector<1x1xf32>
    %102 = arith.addf %99, %101 : vector<1x1xf32>
    %103 = vector.shape_cast %102 : vector<1x1xf32> to vector<1x1x1xf32>
    %104 = vector.shape_cast %103 : vector<1x1x1xf32> to vector<1x1x1xf32>
    %105 = vector.broadcast %104 : vector<1x1x1xf32> to vector<1x1x128xf32>
    %106 = arith.negf %105 : vector<1x1x128xf32>
    %107 = math.exp %106 : vector<1x1x128xf32>
    %cst_60 = arith.constant 1.000000e+00 : f32
    %108 = vector.broadcast %cst_60 : f32 to vector<1x1x128xf32>
    %109 = arith.addf %108, %107 : vector<1x1x128xf32>
    %110 = arith.divf %108, %109 : vector<1x1x128xf32>
    %c0_61 = arith.constant 0 : index
    %c0_62 = arith.constant 0 : index
    %c0_63 = arith.constant 0 : index
    %111 = vector.load %arg7[%c0_61, %c0_62, %c0_63] : memref<1x1x128xf32, #tpu.memory_space<vmem>>, vector<1x1x128xf32>
    tpu.vector_store %arg7[%c0_61, %c0_62, %c0_63], %110 {strides = array<i32>} : memref<1x1x128xf32, #tpu.memory_space<vmem>>, vector<1x1x128xf32>,
    return
  }
  func.func @transform_0(%arg0: i32, %arg1: memref<2x16xi32, #tpu.memory_space<smem>>) -> (i32, i32) {
    %c0_i32 = arith.constant 0 : i32
    %c0_i32_0 = arith.constant 0 : i32
    %c0_i32_1 = arith.constant 0 : i32
    return %c0_i32, %c0_i32_0 : i32, i32
  }
  func.func @transform_1(%arg0: i32, %arg1: memref<2x16xi32, #tpu.memory_space<smem>>) -> (i32, i32) {
    %c0_i32 = arith.constant 0 : i32
    %c0_i32_0 = arith.constant 0 : i32
    %c0_i32_1 = arith.constant 0 : i32
    return %c0_i32, %c0_i32_0 : i32, i32
  }
  func.func @transform_2(%arg0: i32, %arg1: memref<2x16xi32, #tpu.memory_space<smem>>) -> (i32, i32) {
    %c0_i32 = arith.constant 0 : i32
    %c0_i32_0 = arith.constant 0 : i32
    %c0_i32_1 = arith.constant 0 : i32
    return %c0_i32, %c0_i32_0 : i32, i32
  }
  func.func @transform_3(%arg0: i32, %arg1: memref<2x16xi32, #tpu.memory_space<smem>>) -> (i32, i32) {
    %c0_i32 = arith.constant 0 : i32
    %c0_i32_0 = arith.constant 0 : i32
    %c0_i32_1 = arith.constant 0 : i32
    return %c0_i32, %c0_i32_0 : i32, i32
  }
  func.func @transform_4(%arg0: i32, %arg1: memref<2x16xi32, #tpu.memory_space<smem>>) -> (i32, i32) {
    %c0_i32 = arith.constant 0 : i32
    %c0_i32_0 = arith.constant 0 : i32
    %c0_i32_1 = arith.constant 0 : i32
    return %c0_i32, %c0_i32_0 : i32, i32
  }
  func.func @transform_5(%arg0: i32, %arg1: memref<2x16xi32, #tpu.memory_space<smem>>) -> (i32, i32, i32) {
    %c0_i32 = arith.constant 0 : i32
    %c0_i32_0 = arith.constant 0 : i32
    %c0_i32_1 = arith.constant 0 : i32
    return %arg0, %c0_i32, %c0_i32_0 : i32, i32, i32
  }
}

</mosaic_0001>

<llo_original>
// kernel: tpu_custom_call.1
$region0: #{tpu_custom_call.1}
  #allocation0 [shape = 'u32[]', space=smem, size = 0x4, offset = 0x4, fixed_abs, tag = 'smem constant byte address 0x4 - core index']
  #allocation1 [shape = 'u32[72,128]{1,0:T(1,128)}', space=vmem, size = 0x9000, scoped, tag = 'internal scratch']
  #allocation2 [shape = 'f32[16,32]{1,0:T(8,128)}', space=vmem, size = 0x2000, scoped, tag = 'scratch operand']
  #allocation3 [shape = 's32[1]{0}', space=sflag, size = 0x4, scoped, tag = 'scoped memory for tpu_custom_call.1']
  #allocation4 [shape = 'u8[1024]{0}', space=smem, size = 0x400, scoped, tag = 'prefetched SMEM operand 0']
  #allocation5 [shape = 'f32[1,1]{1,0:T(1,128)S(6)}', space=smem, size = 0x200, scoped, tag = 'scoped memory for tpu_custom_call.1']
  %s0 = inlined_call_operand.vmem [shape: s32[2,16], index: 0, kind: input, shape index: {}]
  %s1 = inlined_call_operand.vmem [shape: f32[50,32], index: 1, kind: input, shape index: {}]
  %s2 = inlined_call_operand.hbm [shape: f32[32,384], index: 2, kind: input, shape index: {}]
  %s3 = inlined_call_operand.vmem [shape: f32[1,128], index: 3, kind: input, shape index: {}]
  %s4 = inlined_call_operand.vmem [shape: f32[7,128], index: 4, kind: input, shape index: {}]
  %s5 = inlined_call_operand.<no memory space> [shape: f32[1,1], index: 5, kind: input, shape index: {}]
  %s6 = inlined_call_operand.hbm [shape: f32[2,1,128], index: 6, kind: output, shape index: {}]
  %s7 = sld [smem:[#allocation0]]
  $region57: #{tpu_custom_call.1} parent=0
    _
  %s9 = ssub.s32 1, %s7
  %s10 = scalar_select 0, %s9, %s7
  %s12 = sshll.u32 %s0, 4
  %s13 = int_to_ptr.vmem [resolvable:$true] %s12
  %15 = dma.vmem_to_smem %s13, 32, [#allocation4], [#allocation3]
  %16 = sst [smem:[#allocation5]] %s5
  %18 = dma.done [#allocation3], 32
  %19 = sfence
  $region1: #{tpu_custom_call.1} parent=0
    #allocation6 [shape = 'u8[49152]{0}', space=vmem, size = 0xc000, scoped, tag = 'input window, operand 2, single buffered']
    #allocation7 [shape = 's32[2]{0}', space=sflag, size = 0x8, scoped, tag = 'scoped memory for tpu_custom_call.1']
    #allocation8 [shape = 's32[2]{0}', space=sflag, size = 0x8, scoped, tag = 'scoped memory for tpu_custom_call.1']
    #allocation9 [shape = 'u8[1024]{0}', space=vmem, size = 0x400, scoped, tag = 'output window, operand 0']
    %20 = vsyncpa [#allocation7], 0
    %21 = vsyncpa [#allocation8], 0
    %s22 = scalar_lea.sflag [#allocation8], 1
    %23 = vsyncpa %s22, 0
    loop: start=0, step=1, limit=4
    $region2: #{tpu_custom_call.1} parent=1 // loop_pre_header
      _
    $region3: #{tpu_custom_call.1} parent=1 // loop_header
      %s25 = sphi 0, %s29
      %p26 = scmp.ge.s32.totalorder %s25, 4
      %s33 = sphi 0, %s33
      %s35 = sphi 0, %s33
      %s36 = sphi 0, %s35
      %s50 = sphi 0, %s36
      %s54 = sphi 0, %s54
      %s56 = sphi 0, %s54
      %s57 = sphi 0, %s56
      %s71 = sphi 0, %s57
      %s75 = sphi 0, %s75
      %s77 = sphi 0, %s75
      %s78 = sphi 0, %s77
      %s92 = sphi 0, %s78
      %s96 = sphi 0, %s96
      %s98 = sphi 0, %s96
      %s99 = sphi 0, %s98
      %s113 = sphi 0, %s99
      %s117 = sphi 0, %s117
      %s119 = sphi 0, %s117
      %s120 = sphi 0, %s119
      %s134 = sphi 0, %s120
      %s140 = sphi 0, %s142
      %s143 = sphi 0, %s140
      %s144 = sphi 0, %s143
      %s160 = sphi 0, %s144
    $region4: #{tpu_custom_call.1} parent=1 // loop_header_branch
      %28 = sbr.rel (%p26) target = $region8
    $region5: #{tpu_custom_call.1} parent=1 // loop_body
      %s30 = ssub.s32 %s25, 1
      %s31 = ssub.s32 %s25, 2
      %s32 = sadd.s32 %s25, 1
      %s34 = sadd.s32 %s33, 1
      %p37 = scmp.eq.s32.totalorder %s25, 1
      %p38 = scmp.ne.s32.totalorder %s33, %s35
      %p39 = scmp.eq.s32.totalorder %s25, 0
      %p40 = por %p38, %p39
      %p41 = scmp.ne.s32.totalorder %s33, %s35
      %p42 = scmp.eq.s32.totalorder %s30, 1
      %p43 = por %p41, %p42
      %p44 = scmp.ne.s32.totalorder %s35, %s36
      %p45 = scmp.eq.s32.totalorder %s30, 0
      %p46 = por %p44, %p45
      %p47 = scmp.ne.s32.totalorder %s35, %s36
      %p48 = scmp.eq.s32.totalorder %s31, 1
      %p49 = por %p47, %p48
      %p51 = scmp.ne.s32.totalorder %s36, %s50
      %p52 = scmp.eq.s32.totalorder %s31, 0
      %p53 = por %p51, %p52
      %s55 = sadd.s32 %s54, 1
      %p58 = scmp.eq.s32.totalorder %s25, 1
      %p59 = scmp.ne.s32.totalorder %s54, %s56
      %p60 = scmp.eq.s32.totalorder %s25, 0
      %p61 = por %p59, %p60
      %p62 = scmp.ne.s32.totalorder %s54, %s56
      %p63 = scmp.eq.s32.totalorder %s30, 1
      %p64 = por %p62, %p63
      %p65 = scmp.ne.s32.totalorder %s56, %s57
      %p66 = scmp.eq.s32.totalorder %s30, 0
      %p67 = por %p65, %p66
      %p68 = scmp.ne.s32.totalorder %s56, %s57
      %p69 = scmp.eq.s32.totalorder %s31, 1
      %p70 = por %p68, %p69
      %p72 = scmp.ne.s32.totalorder %s57, %s71
      %p73 = scmp.eq.s32.totalorder %s31, 0
      %p74 = por %p72, %p73
      %s76 = sadd.s32 %s75, 1
      %p79 = scmp.eq.s32.totalorder %s25, 1
      %p80 = scmp.ne.s32.totalorder %s75, %s77
      %p81 = scmp.eq.s32.totalorder %s25, 0
      %p82 = por %p80, %p81
      %p83 = scmp.ne.s32.totalorder %s75, %s77
      %p84 = scmp.eq.s32.totalorder %s30, 1
      %p85 = por %p83, %p84
      %p86 = scmp.ne.s32.totalorder %s77, %s78
      %p87 = scmp.eq.s32.totalorder %s30, 0
      %p88 = por %p86, %p87
      %p89 = scmp.ne.s32.totalorder %s77, %s78
      %p90 = scmp.eq.s32.totalorder %s31, 1
      %p91 = por %p89, %p90
      %p93 = scmp.ne.s32.totalorder %s78, %s92
      %p94 = scmp.eq.s32.totalorder %s31, 0
      %p95 = por %p93, %p94
      %s97 = sadd.s32 %s96, 1
      %p100 = scmp.eq.s32.totalorder %s25, 1
      %p101 = scmp.ne.s32.totalorder %s96, %s98
      %p102 = scmp.eq.s32.totalorder %s25, 0
      %p103 = por %p101, %p102
      %p104 = scmp.ne.s32.totalorder %s96, %s98
      %p105 = scmp.eq.s32.totalorder %s30, 1
      %p106 = por %p104, %p105
      %p107 = scmp.ne.s32.totalorder %s98, %s99
      %p108 = scmp.eq.s32.totalorder %s30, 0
      %p109 = por %p107, %p108
      %p110 = scmp.ne.s32.totalorder %s98, %s99
      %p111 = scmp.eq.s32.totalorder %s31, 1
      %p112 = por %p110, %p111
      %p114 = scmp.ne.s32.totalorder %s99, %s113
      %p115 = scmp.eq.s32.totalorder %s31, 0
      %p116 = por %p114, %p115
      %s118 = sadd.s32 %s117, 1
      %p121 = scmp.eq.s32.totalorder %s25, 1
      %p122 = scmp.ne.s32.totalorder %s117, %s119
      %p123 = scmp.eq.s32.totalorder %s25, 0
      %p124 = por %p122, %p123
      %p125 = scmp.ne.s32.totalorder %s117, %s119
      %p126 = scmp.eq.s32.totalorder %s30, 1
      %p127 = por %p125, %p126
      %p128 = scmp.ne.s32.totalorder %s119, %s120
      %p129 = scmp.eq.s32.totalorder %s30, 0
      %p130 = por %p128, %p129
      %p131 = scmp.ne.s32.totalorder %s119, %s120
      %p132 = scmp.eq.s32.totalorder %s31, 1
      %p133 = por %p131, %p132
      %p135 = scmp.ne.s32.totalorder %s120, %s134
      %p136 = scmp.eq.s32.totalorder %s31, 0
      %p137 = por %p135, %p136
      %s138 = ssub.s32 %s25, %s32
      %p139 = scmp.eq.s32.totalorder %s138, 0
      %s141 = sadd.s32 %s140, 1
      %s142 = scalar_select %p139, %s140, %s141
      %p145 = pneg %p139
      %p146 = scmp.eq.s32.totalorder %s25, 1
      %p147 = por %p145, %p146
      %p148 = scmp.ne.s32.totalorder %s140, %s143
      %p149 = scmp.eq.s32.totalorder %s25, 0
      %p150 = por %p148, %p149
      %p151 = scmp.ne.s32.totalorder %s140, %s143
      %p152 = scmp.eq.s32.totalorder %s30, 1
      %p153 = por %p151, %p152
      %p154 = scmp.ne.s32.totalorder %s143, %s144
      %p155 = scmp.eq.s32.totalorder %s30, 0
      %p156 = por %p154, %p155
      %p157 = scmp.ne.s32.totalorder %s143, %s144
      %p158 = scmp.eq.s32.totalorder %s31, 1
      %p159 = por %p157, %p158
      %p161 = scmp.ne.s32.totalorder %s144, %s160
      %p162 = scmp.eq.s32.totalorder %s31, 0
      %p163 = por %p161, %p162
      %p164 = scmp.le.s32.totalorder 1, %s25
      %p165 = scmp.lt.s32.totalorder %s25, 3
      %p166 = pnand %p164, %p165
      %p167 = pneg %p166
      // Predicated region
      $region9: #{tpu_custom_call.1} parent=5 // pred_check
        _
      $region10: #{tpu_custom_call.1} parent=5 // pred_check_branch
        %169 = sbr.rel (%p166) target = $region12
      $region11: #{tpu_custom_call.1} parent=5 // pred_region
        %s170 = ssub.s32 %s25, 1
        // Predicated region
        $region13: #{tpu_custom_call.1} parent=11 // pred_check
          %p171 = pneg %p46
        $region14: #{tpu_custom_call.1} parent=11 // pred_check_branch
          %173 = sbr.rel (%p171) target = $region16
        $region15: #{tpu_custom_call.1} parent=11 // pred_region
          _
        $region16: #{tpu_custom_call.1} parent=11 // pred_fallthru
          _
        // Predicated region
        $region17: #{tpu_custom_call.1} parent=11 // pred_check
          %p174 = pneg %p67
        $region18: #{tpu_custom_call.1} parent=11 // pred_check_branch
          %176 = sbr.rel (%p174) target = $region20
        $region19: #{tpu_custom_call.1} parent=11 // pred_region
          %178 = vsyncadd [#allocation7], 0
          %s179 = sshll.u32 %s2, 4
          %s180 = int_to_ptr.hbm [resolvable:$true] %s179
          %s181 = sshll.u32 [#allocation6], 4
          %s182 = int_to_ptr.vmem [resolvable:$true] %s181
          %187 = dma.hbm_to_vmem [thread:$0]  %s180, 1536, %s182, [#allocation7], 384, 384, 24
        $region20: #{tpu_custom_call.1} parent=11 // pred_fallthru
          _
        // Predicated region
        $region21: #{tpu_custom_call.1} parent=11 // pred_check
          %p188 = pneg %p88
        $region22: #{tpu_custom_call.1} parent=11 // pred_check_branch
          %190 = sbr.rel (%p188) target = $region24
        $region23: #{tpu_custom_call.1} parent=11 // pred_region
          _
        $region24: #{tpu_custom_call.1} parent=11 // pred_fallthru
          _
        // Predicated region
        $region25: #{tpu_custom_call.1} parent=11 // pred_check
          %p191 = pneg %p109
        $region26: #{tpu_custom_call.1} parent=11 // pred_check_branch
          %193 = sbr.rel (%p191) target = $region28
        $region27: #{tpu_custom_call.1} parent=11 // pred_region
          _
        $region28: #{tpu_custom_call.1} parent=11 // pred_fallthru
          _
        // Predicated region
        $region29: #{tpu_custom_call.1} parent=11 // pred_check
          %p194 = pneg %p130
        $region30: #{tpu_custom_call.1} parent=11 // pred_check_branch
          %196 = sbr.rel (%p194) target = $region32
        $region31: #{tpu_custom_call.1} parent=11 // pred_region
          _
        $region32: #{tpu_custom_call.1} parent=11 // pred_fallthru
          _
      $region12: #{tpu_custom_call.1} parent=5 // pred_fallthru
        _
      %p197 = scmp.lt.s32.totalorder %s25, 2
      // Predicated region
      $region33: #{tpu_custom_call.1} parent=5 // pred_check
        %p198 = pneg %p197
      $region34: #{tpu_custom_call.1} parent=5 // pred_check_branch
        %200 = sbr.rel (%p198) target = $region36
      $region35: #{tpu_custom_call.1} parent=5 // pred_region
        _
      $region36: #{tpu_custom_call.1} parent=5 // pred_fallthru
        _
      %p201 = scmp.le.s32.totalorder 1, %s25
      %p202 = scmp.lt.s32.totalorder %s25, 3
      %p203 = pnand %p201, %p202
      %p204 = pneg %p203
      // Predicated region
      $region37: #{tpu_custom_call.1} parent=5 // pred_check
        _
      $region38: #{tpu_custom_call.1} parent=5 // pred_check_branch
        %206 = sbr.rel (%p203) target = $region40
      $region39: #{tpu_custom_call.1} parent=5 // pred_region
        %s207 = ssub.s32 %s25, 1
        // Predicated region
        $region41: #{tpu_custom_call.1} parent=39 // pred_check
          %p208 = pneg %p67
        $region42: #{tpu_custom_call.1} parent=39 // pred_check_branch
          %210 = sbr.rel (%p208) target = $region44
        $region43: #{tpu_custom_call.1} parent=39 // pred_region
          %212 = dma.done [#allocation7], 1536
        $region44: #{tpu_custom_call.1} parent=39 // pred_fallthru
          _
        %p213 = pneg %p46
        %p214 = pneg %p43
        %p215 = pneg %p67
        %p216 = pneg %p64
        %p217 = pneg %p88
        %p218 = pneg %p85
        %p219 = pneg %p109
        %p220 = pneg %p106
        %p221 = pneg %p130
        %p222 = pneg %p127
        %p223 = pneg %p156
        %p224 = pneg %p153
        %s225 = sand.u32 %s143, 1
        %s226 = scalar_lea.sflag [#allocation8], %s225
        %s227 = sand.u32 %s143, 1
        %s228 = scalar_lea.vmem [#allocation9], %s227
        %s229 = smul.u32 %s30, 128
        %s230 = sld [smem:[#allocation4 + %s229]]
        %s231 = scalar_lea.vmem %s1, %s230
        %v232 = vld [vmem:[%s231] sm:$0x1]
        %vm233 = vcmask 253952
        %234 = vst.msk [vmem:[#allocation2] sm:$0x1] %vm233, %v232
        %s235 = sadd.s32 %s229, 1
        %s236 = sld [smem:[#allocation4 + %s235]]
        %s237 = scalar_lea.vmem %s1, %s236
        %v238 = vld [vmem:[%s237] sm:$0x1]
        %239 = vst.msk [vmem:[#allocation2 + $0x1] sm:$0x1] %vm233, %v238
        %s240 = sadd.s32 %s229, 2
        %s241 = sld [smem:[#allocation4 + %s240]]
        %s242 = scalar_lea.vmem %s1, %s241
        %v243 = vld [vmem:[%s242] sm:$0x1]
        %244 = vst.msk [vmem:[#allocation2 + $0x2] sm:$0x1] %vm233, %v243
        %s245 = sadd.s32 %s229, 3
        %s246 = sld [smem:[#allocation4 + %s245]]
        %s247 = scalar_lea.vmem %s1, %s246
        %v248 = vld [vmem:[%s247] sm:$0x1]
        %249 = vst.msk [vmem:[#allocation2 + $0x3] sm:$0x1] %vm233, %v248
        %s250 = sadd.s32 %s229, 4
        %s251 = sld [smem:[#allocation4 + %s250]]
        %s252 = scalar_lea.vmem %s1, %s251
        %v253 = vld [vmem:[%s252] sm:$0x1]
        %254 = vst.msk [vmem:[#allocation2 + $0x4] sm:$0x1] %vm233, %v253
        %s255 = sadd.s32 %s229, 5
        %s256 = sld [smem:[#allocation4 + %s255]]
        %s257 = scalar_lea.vmem %s1, %s256
        %v258 = vld [vmem:[%s257] sm:$0x1]
        %259 = vst.msk [vmem:[#allocation2 + $0x5] sm:$0x1] %vm233, %v258
        %s260 = sadd.s32 %s229, 6
        %s261 = sld [smem:[#allocation4 + %s260]]
        %s262 = scalar_lea.vmem %s1, %s261
        %v263 = vld [vmem:[%s262] sm:$0x1]
        %264 = vst.msk [vmem:[#allocation2 + $0x6] sm:$0x1] %vm233, %v263
        %s265 = sadd.s32 %s229, 7
        %s266 = sld [smem:[#allocation4 + %s265]]
        %s267 = scalar_lea.vmem %s1, %s266
        %v268 = vld [vmem:[%s267] sm:$0x1]
        %269 = vst.msk [vmem:[#allocation2 + $0x7] sm:$0x1] %vm233, %v268
        %s270 = sadd.s32 %s229, 8
        %s271 = sld [smem:[#allocation4 + %s270]]
        %s272 = scalar_lea.vmem %s1, %s271
        %v273 = vld [vmem:[%s272] sm:$0x1]
        %274 = vst.msk [vmem:[#allocation2 + $0x8] sm:$0x1] %vm233, %v273
        %s275 = sadd.s32 %s229, 9
        %s276 = sld [smem:[#allocation4 + %s275]]
        %s277 = scalar_lea.vmem %s1, %s276
        %v278 = vld [vmem:[%s277] sm:$0x1]
        %279 = vst.msk [vmem:[#allocation2 + $0x9] sm:$0x1] %vm233, %v278
        %s280 = sadd.s32 %s229, 10
        %s281 = sld [smem:[#allocation4 + %s280]]
        %s282 = scalar_lea.vmem %s1, %s281
        %v283 = vld [vmem:[%s282] sm:$0x1]
        %284 = vst.msk [vmem:[#allocation2 + $0xa] sm:$0x1] %vm233, %v283
        %s285 = sadd.s32 %s229, 11
        %s286 = sld [smem:[#allocation4 + %s285]]
        %s287 = scalar_lea.vmem %s1, %s286
        %v288 = vld [vmem:[%s287] sm:$0x1]
        %289 = vst.msk [vmem:[#allocation2 + $0xb] sm:$0x1] %vm233, %v288
        %s290 = sadd.s32 %s229, 12
        %s291 = sld [smem:[#allocation4 + %s290]]
        %s292 = scalar_lea.vmem %s1, %s291
        %v293 = vld [vmem:[%s292] sm:$0x1]
        %294 = vst.msk [vmem:[#allocation2 + $0xc] sm:$0x1] %vm233, %v293
        %s295 = sadd.s32 %s229, 13
        %s296 = sld [smem:[#allocation4 + %s295]]
        %s297 = scalar_lea.vmem %s1, %s296
        %v298 = vld [vmem:[%s297] sm:$0x1]
        %299 = vst.msk [vmem:[#allocation2 + $0xd] sm:$0x1] %vm233, %v298
        %s300 = sadd.s32 %s229, 14
        %s301 = sld [smem:[#allocation4 + %s300]]
        %s302 = scalar_lea.vmem %s1, %s301
        %v303 = vld [vmem:[%s302] sm:$0x1]
        %304 = vst.msk [vmem:[#allocation2 + $0xe] sm:$0x1] %vm233, %v303
        %s305 = sadd.s32 %s229, 15
        %s306 = sld [smem:[#allocation4 + %s305]]
        %s307 = scalar_lea.vmem %s1, %s306
        %v308 = vld [vmem:[%s307] sm:$0x1]
        %309 = vst.msk [vmem:[#allocation2 + $0xf] sm:$0x1] %vm233, %v308
        %v310 = vld [vmem:[#allocation2] sm:$0xff]
        %v311 = vld [vmem:[#allocation2 + $0x8] sm:$0xff]
        %v312 = vld [vmem:[#allocation6] sm:$0xff]
        %v313 = vld [vmem:[#allocation6 + $0x8] sm:$0xff]
        %v314 = vld [vmem:[#allocation6 + $0x10] sm:$0xff]
        %v315 = vld [vmem:[#allocation6 + $0x18] sm:$0xff]
        %v316 = vld [vmem:[#allocation6 + $0x20] sm:$0xff]
        %v317 = vld [vmem:[#allocation6 + $0x28] sm:$0xff]
        %v318 = vld [vmem:[#allocation6 + $0x30] sm:$0xff]
        %v319 = vld [vmem:[#allocation6 + $0x38] sm:$0xff]
        %v320 = vld [vmem:[#allocation6 + $0x40] sm:$0xff]
        %v321 = vld [vmem:[#allocation6 + $0x48] sm:$0xff]
        %v322 = vld [vmem:[#allocation6 + $0x50] sm:$0xff]
        %v323 = vld [vmem:[#allocation6 + $0x58] sm:$0xff]
        %vm324 = vcmask 261120
        %v326 = vsel %vm324, %v310, 0
        %v329 = vsel %vm324, %v311, 0
        %331 = vmatpush.msra.mxu0 0.0
        %332 = vmatpush.msra.mxu0 0.0
        %333 = vmatpush.msra.mxu0 0.0
        %334 = vmatpush.msra.mxu0 0.0
        %335 = vmatpush.msra.mxu0 0.0
        %336 = vmatpush.msra.mxu0 0.0
        %337 = vmatpush.msra.mxu0 0.0
        %338 = vmatpush.msra.mxu0 0.0
        %339 = vmatpush.msra.mxu0 0.0
        %340 = vmatpush.msra.mxu0 0.0
        %341 = vmatpush.msra.mxu0 0.0
        %342 = vmatpush.msra.mxu0 0.0
        %343 = vmatpush.msra.mxu0 %v321
        %344 = vmatpush.msra.mxu0 %v318
        %345 = vmatpush.msra.mxu0 %v315
        %346 = vmatpush.msra.mxu0 %v312
        %347 = vmatmul.f32.gmra.mxu0 %v326
        %v348 = vpop.f32.mrf.mxu0
        %v349 = vadd.f32 0.0, %v348
        %350 = vmatmul.f32.gmra.mxu0 %v329
        %v351 = vpop.f32.mrf.mxu0
        %v352 = vadd.f32 0.0, %v351
        %353 = vdwg.mxu0
        %354 = vmatpush.msra.mxu0 0.0
        %355 = vmatpush.msra.mxu0 0.0
        %356 = vmatpush.msra.mxu0 0.0
        %357 = vmatpush.msra.mxu0 0.0
        %358 = vmatpush.msra.mxu0 0.0
        %359 = vmatpush.msra.mxu0 0.0
        %360 = vmatpush.msra.mxu0 0.0
        %361 = vmatpush.msra.mxu0 0.0
        %362 = vmatpush.msra.mxu0 0.0
        %363 = vmatpush.msra.mxu0 0.0
        %364 = vmatpush.msra.mxu0 0.0
        %365 = vmatpush.msra.mxu0 0.0
        %366 = vmatpush.msra.mxu0 %v322
        %367 = vmatpush.msra.mxu0 %v319
        %368 = vmatpush.msra.mxu0 %v316
        %369 = vmatpush.msra.mxu0 %v313
        %370 = vmatmul.f32.gmra.mxu0 %v326
        %v371 = vpop.f32.mrf.mxu0
        %v372 = vadd.f32 0.0, %v371
        %373 = vmatmul.f32.gmra.mxu0 %v329
        %v374 = vpop.f32.mrf.mxu0
        %v375 = vadd.f32 0.0, %v374
        %376 = vdwg.mxu0
        %377 = vmatpush.msra.mxu0 0.0
        %378 = vmatpush.msra.mxu0 0.0
        %379 = vmatpush.msra.mxu0 0.0
        %380 = vmatpush.msra.mxu0 0.0
        %381 = vmatpush.msra.mxu0 0.0
        %382 = vmatpush.msra.mxu0 0.0
        %383 = vmatpush.msra.mxu0 0.0
        %384 = vmatpush.msra.mxu0 0.0
        %385 = vmatpush.msra.mxu0 0.0
        %386 = vmatpush.msra.mxu0 0.0
        %387 = vmatpush.msra.mxu0 0.0
        %388 = vmatpush.msra.mxu0 0.0
        %389 = vmatpush.msra.mxu0 %v323
        %390 = vmatpush.msra.mxu0 %v320
        %391 = vmatpush.msra.mxu0 %v317
        %392 = vmatpush.msra.mxu0 %v314
        %393 = vmatmul.f32.gmra.mxu0 %v326
        %v394 = vpop.f32.mrf.mxu0
        %v395 = vadd.f32 0.0, %v394
        %396 = vmatmul.f32.gmra.mxu0 %v329
        %v397 = vpop.f32.mrf.mxu0
        %v398 = vadd.f32 0.0, %v397
        %399 = vdwg.mxu0
        %vm402 = vcmask 1046528
        %v403 = vrot.slane %v372, 1
        %v404 = vrot.slane %v375, 1
        %v405 = vsel %vm402, %v403, %v404
        %v408 = vadd.f32 %v349, %v405
        %v409 = vadd.f32 %v352, %v404
        %vm412 = vcmask 1045504
        %v413 = vrot.slane %v395, 2
        %v414 = vrot.slane %v398, 2
        %v415 = vsel %vm412, %v413, %v414
        %v418 = vadd.f32 %v408, %v415
        %v419 = vadd.f32 %v409, %v414
        %v420 = vld [vmem:[%s3] sm:$0x1]
        %v422 = vperm.slane %v420, 0
        %v424 = vadd.f32 %v418, %v422
        %v425 = vadd.f32 %v419, %v422
        %v428 = vrot.slane %v424, 2
        %v429 = vrot.slane %v424, 4
        %v430 = vrot.slane %v424, 6
        %v431 = vrot.slane %v425, 2
        %v432 = vrot.slane %v425, 4
        %vm438 = vcmask 1041408
        %v439 = vsel %vm438, %v424, -inf
        %v440 = vrot.slane %v439, 4
        %v441 = vmax.f32 %v439, %v440
        %v442 = vrot.slane %v441, 2
        %v443 = vmax.f32 %v441, %v442
        %v444 = vrot.slane %v443, 1
        %v445 = vmax.f32 %v443, %v444
        %v446 = vsel %vm438, %v428, -inf
        %v447 = vrot.slane %v446, 4
        %v448 = vmax.f32 %v446, %v447
        %v449 = vrot.slane %v448, 2
        %v450 = vmax.f32 %v448, %v449
        %v451 = vrot.slane %v450, 1
        %v452 = vmax.f32 %v450, %v451
        %v453 = vsel %vm438, %v429, -inf
        %v454 = vrot.slane %v453, 4
        %v455 = vmax.f32 %v453, %v454
        %v456 = vrot.slane %v455, 2
        %v457 = vmax.f32 %v455, %v456
        %v458 = vrot.slane %v457, 1
        %v459 = vmax.f32 %v457, %v458
        %v460 = vsel %vm438, %v430, -inf
        %v461 = vrot.slane %v460, 4
        %v462 = vmax.f32 %v460, %v461
        %v463 = vrot.slane %v462, 2
        %v464 = vmax.f32 %v462, %v463
        %v465 = vrot.slane %v464, 1
        %v466 = vmax.f32 %v464, %v465
        %v467 = vsel %vm438, %v425, -inf
        %v468 = vrot.slane %v467, 4
        %v469 = vmax.f32 %v467, %v468
        %v470 = vrot.slane %v469, 2
        %v471 = vmax.f32 %v469, %v470
        %v472 = vrot.slane %v471, 1
        %v473 = vmax.f32 %v471, %v472
        %v474 = vsel %vm438, %v431, -inf
        %v475 = vrot.slane %v474, 4
        %v476 = vmax.f32 %v474, %v475
        %v477 = vrot.slane %v476, 2
        %v478 = vmax.f32 %v476, %v477
        %v479 = vrot.slane %v478, 1
        %v480 = vmax.f32 %v478, %v479
        %v481 = vsel %vm438, %v432, -inf
        %v482 = vrot.slane %v481, 4
        %v483 = vmax.f32 %v481, %v482
        %v484 = vrot.slane %v483, 2
        %v485 = vmax.f32 %v483, %v484
        %v486 = vrot.slane %v485, 1
        %v487 = vmax.f32 %v485, %v486
        %v488 = vld [vmem:[%s4] sm:$0x7f]
        %v490 = vrot.slane %v488, 1
        %v491 = vrot.slane %v488, 2
        %v492 = vrot.slane %v488, 3
        %v493 = vrot.slane %v488, 4
        %v494 = vrot.slane %v488, 5
        %v495 = vrot.slane %v488, 6
        %v503 = vmul.f32 %v445, %v488
        %v504 = vmul.f32 %v452, %v490
        %v505 = vmul.f32 %v459, %v491
        %v506 = vmul.f32 %v466, %v492
        %v507 = vmul.f32 %v473, %v493
        %v508 = vmul.f32 %v480, %v494
        %v509 = vmul.f32 %v487, %v495
        %v517 = vrot.slane %v504, 7
        %vm518 = vcmask 1041409
        %v519 = vsel %vm518, %v517, %v503
        %v520 = vrot.slane %v505, 6
        %vm521 = vcmask 1042434
        %v522 = vsel %vm521, %v520, %v519
        %v523 = vrot.slane %v506, 5
        %vm524 = vcmask 1043459
        %v525 = vsel %vm524, %v523, %v522
        %v526 = vrot.slane %v507, 4
        %vm527 = vcmask 1044484
        %v528 = vsel %vm527, %v526, %v525
        %v529 = vrot.slane %v508, 3
        %vm530 = vcmask 1045509
        %v531 = vsel %vm530, %v529, %v528
        %v532 = vrot.slane %v509, 2
        %vm533 = vcmask 1046534
        %v534 = vsel %vm533, %v532, %v531
        %v536 = vsel %vm402, %v534, 0.0
        %537 = vadd.xlane.f32.xlu0 %v536
        %v538 = vpop.xlane.xlu0 %537
        %v539 = vrot.slane %v538, 4
        %v540 = vadd.f32 %v538, %v539
        %v541 = vrot.slane %v540, 2
        %v542 = vadd.f32 %v540, %v541
        %v543 = vrot.slane %v542, 1
        %v544 = vadd.f32 %v542, %v543
        %s545 = vtos %v544
        %v546 = vstv %s545
        %s547 = sld [smem:[#allocation5]]
        %v548 = vstv %s547
        %v549 = vadd.f32 %v546, %v548
        %v550 = vxor.u32 %v549, 2147483648
        %v551 = vmul.f32 %v550, 1.442695
        %v552 = vpow.pop %v551
        %v553 = vadd.f32 %v552, 1.0
        %v554 = vrcp.pop %v553
        %v555 = vmul.f32 %v553, %v554
        %v556 = vsub.f32 1.0, %v555
        %v557 = vmul.f32 %v554, %v556
        %v558 = vadd.f32 %v554, %v557
        %vm559 = vweird.f32 %v553
        %vm560 = vweird.f32 %v554
        %vm561 = vmor %vm559, %vm560
        %v562 = vsel %vm561, %v554, %v558
        %v563 = vand.u32 2147483647, %v553
        %vm564 = vcmp.eq.f32.partialorder %v563, 8.507059e+37
        %v565 = vand.u32 %v553, 2147483648
        %v566 = vor.u32 1.1754944e-38, %v565
        %v567 = vsel %vm564, %v566, %v562
        %v568 = vmul.f32 1.0, %v567
        %569 = vst [vmem:[%s228] sm:$0x1] %v568
        %s570 = sand.u32 %s143, 1
        %s571 = scalar_lea.sflag [#allocation8], %s570
        %s572 = sand.u32 %s143, 1
        %s573 = scalar_lea.vmem [#allocation9], %s572
        // Predicated region
        $region45: #{tpu_custom_call.1} parent=39 // pred_check
          %p574 = pneg %p153
        $region46: #{tpu_custom_call.1} parent=39 // pred_check_branch
          %576 = sbr.rel (%p574) target = $region48
        $region47: #{tpu_custom_call.1} parent=39 // pred_region
          %578 = vsyncadd %s571, 0
          %s579 = scalar_lea.hbm %s6, %s30
          %s581 = sshll.u32 %s573, 4
          %s582 = int_to_ptr.vmem [resolvable:$true] %s581
          %s583 = sshll.u32 %s579, 4
          %s584 = int_to_ptr.hbm [resolvable:$true] %s583
          %586 = dma.vmem_to_hbm [thread:$0]  %s582, 16, %s584, %s571
        $region48: #{tpu_custom_call.1} parent=39 // pred_fallthru
          _
      $region40: #{tpu_custom_call.1} parent=5 // pred_fallthru
        _
      %p587 = scmp.le.s32.totalorder 2, %s25
      // Predicated region
      $region49: #{tpu_custom_call.1} parent=5 // pred_check
        %p588 = pneg %p587
      $region50: #{tpu_custom_call.1} parent=5 // pred_check_branch
        %590 = sbr.rel (%p588) target = $region52
      $region51: #{tpu_custom_call.1} parent=5 // pred_region
        %s591 = ssub.s32 %s25, 2
        // Predicated region
        $region53: #{tpu_custom_call.1} parent=51 // pred_check
          %p592 = pneg %p159
        $region54: #{tpu_custom_call.1} parent=51 // pred_check_branch
          %594 = sbr.rel (%p592) target = $region56
        $region55: #{tpu_custom_call.1} parent=51 // pred_region
          %s595 = sand.u32 %s144, 1
          %s596 = scalar_lea.sflag [#allocation8], %s595
          %s597 = sand.u32 %s144, 1
          %s598 = scalar_lea.vmem [#allocation9], %s597
          %600 = dma.done %s596, 16
        $region56: #{tpu_custom_call.1} parent=51 // pred_fallthru
          _
      $region52: #{tpu_custom_call.1} parent=5 // pred_fallthru
        _
    $region6: #{tpu_custom_call.1} parent=1 // loop_footer
      %s29 = sadd.s32 1, %s25
    $region7: #{tpu_custom_call.1} parent=1 // loop_footer_branch
      %24 = sbr.rel target = $region3
    $region8: #{tpu_custom_call.1} parent=1 // loop_exit
      _
    %601 = vsyncpa [#allocation7], 1
    %s602 = scalar_lea.sflag [#allocation7], 1
    %603 = vsyncpa %s602, 1
    %604 = vsyncpa [#allocation8], 1
    %s605 = scalar_lea.sflag [#allocation8], 1
    %606 = vsyncpa %s605, 1

</llo_original>
